<compile_context>
chip_gen: v7x
topology: tpu7x:2x2x1
jax: 0.10.0
libtpu: 0.0.40
codegen_flags: <defaults>
</compile_context>

<pallas_src>
import jax
import jax.numpy as jnp
from jax.experimental import pallas as pl
from jax.experimental.pallas import tpu as pltpu


def _round_up(n, m):
    return ((n + m - 1) // m) * m


def _pad2d(a, rows, cols):
    pr, pc = rows - a.shape[0], cols - a.shape[1]
    if pr == 0 and pc == 0:
        return a
    return jnp.pad(a, ((0, pr), (0, pc)))


def _vmem_capacity_bytes():
    """Physical VMEM per core, with a conservative fallback."""
    try:
        info = pltpu.get_tpu_info()
        cap = getattr(info, "vmem_capacity_bytes", None)
        if cap:
            return int(cap)
    except Exception:
        pass
    return 64 * 1024 * 1024  # v7x per-TC physical; safe lower bound everywhere


def grn_kernel(x_ref, w1_ref, b1_ref, w2_ref, b2_ref, o_ref, acc_ref):
    # Grid: (row tiles [parallel], hidden-dim chunks [arbitrary reduction]).
    # x_ref : (tm, Dp)    w1_ref: (Dp, hk)   b1_ref: (1, hk)
    # w2_ref: (hk, Dp)    b2_ref: (1, Dp)    o_ref : (tm, Dp)
    # acc_ref: (tm, Dp) f32 VMEM accumulator for the Linear2 partial sums.
    k = pl.program_id(1)

    @pl.when(k == 0)
    def _init():
        acc_ref[...] = jnp.zeros_like(acc_ref)

    x = x_ref[...]

    # Linear1 chunk + ReLU: (tm, Dp) @ (Dp, hk) on the MXU, f32 accumulate.
    h = jnp.dot(x, w1_ref[...], preferred_element_type=jnp.float32)
    h = jnp.maximum(h + b1_ref[...].astype(jnp.float32), 0.0)

    # Linear2 partial: accumulate (tm, hk) @ (hk, Dp) into the f32 scratch.
    acc_ref[...] += jnp.dot(h.astype(w2_ref.dtype), w2_ref[...],
                            preferred_element_type=jnp.float32)

    @pl.when(k == pl.num_programs(1) - 1)
    def _finalize():
        y = acc_ref[...] + b2_ref[...].astype(jnp.float32)
        gate = jax.nn.sigmoid(y)
        xf = x.astype(jnp.float32)
        o_ref[...] = (xf + gate * (y - xf)).astype(o_ref.dtype)


def prepare_grn_params(w1, b1, w2, b2, *, lane=128, hk_target=512):
    """Pad weights/biases once (call-invariant) and pick the hidden chunk.

    w1: (input_dim, hidden_dim), w2: (hidden_dim, input_dim) — i.e. nn.Linear
    weights already transposed to (in, out).
    """
    input_dim, hidden_dim = w1.shape
    d_pad = _round_up(input_dim, lane)
    # Hidden chunk: multiple of 128, capped at hk_target (256x256 MXU friendly
    # on v6e/v7x); hidden_dim is zero-padded to a multiple of the chunk.
    hk = min(hk_target, _round_up(hidden_dim, lane))
    h_pad = _round_up(hidden_dim, hk)

    return dict(
        w1=_pad2d(w1, d_pad, h_pad),
        b1=_pad2d(b1.reshape(1, -1), 1, h_pad),
        w2=_pad2d(w2, h_pad, d_pad),
        b2=_pad2d(b2.reshape(1, -1), 1, d_pad),
        input_dim=input_dim, hidden_dim=hidden_dim,
        d_pad=d_pad, h_pad=h_pad, hk=hk,
    )


def gated_residual_network(x, params, *, target_x_tile_bytes=4 << 20):
    """x: (..., input_dim). params: output of prepare_grn_params."""
    input_dim = params["input_dim"]
    d_pad, h_pad, hk = params["d_pad"], params["h_pad"], params["hk"]

    orig_shape = x.shape
    x2d = x.reshape(-1, input_dim)
    n_rows = x2d.shape[0]

    itemsize = x.dtype.itemsize
    w_item = params["w1"].dtype.itemsize
    sublane = max(8, 32 // itemsize)          # 8 f32 / 16 bf16 / 32 int8
    rows_rounded = _round_up(n_rows, sublane)

    # --- Row tile: byte-budget driven, clamped by VMEM and the row count. ---
    tm_budget = max(sublane,
                    (target_x_tile_bytes // (d_pad * itemsize)) // sublane * sublane)

    vmem_cap = _vmem_capacity_bytes()
    vmem_headroom = 16 << 20                  # compiler-internal scratch slack
    # Resident bytes that do not scale with tm: double-buffered W1/W2 chunks
    # + biases.
    fixed_bytes = 2 * 2 * d_pad * hk * w_item + 2 * (hk + d_pad) * 4
    # Per-row bytes: x (2 buf) + out (2 buf) + f32 accumulator + h chunk temp.
    per_row_bytes = 4 * d_pad * itemsize + d_pad * 4 + hk * 4
    tm_vmem = max(sublane,
                  ((vmem_cap - vmem_headroom - fixed_bytes) // per_row_bytes)
                  // sublane * sublane)

    tm = min(tm_budget, tm_vmem, rows_rounded)

    # v7x megacore: if a big input would land in a single row step, split it
    # so the "parallel" axis has >= 2 steps (both TensorCores busy).
    if rows_rounded <= tm and rows_rounded >= 2048:
        tm = _round_up((rows_rounded + 1) // 2, sublane)

    n_rows_pad = _round_up(n_rows, tm)

    # --- Pad activations only if actually needed (aligned shapes copy-free). ---
    if n_rows_pad != n_rows or d_pad != input_dim:
        x_p = jnp.pad(x2d, ((0, n_rows_pad - n_rows), (0, d_pad - input_dim)))
    else:
        x_p = x2d

    grid = (n_rows_pad // tm, h_pad // hk)

    vmem_need = fixed_bytes + tm * per_row_bytes
    vmem_limit = int(min(max(vmem_need + (8 << 20), 32 << 20),
                         vmem_cap - (8 << 20)))

    out = pl.pallas_call(
        grn_kernel,
        out_shape=jax.ShapeDtypeStruct((n_rows_pad, d_pad), x.dtype),
        grid_spec=pltpu.PrefetchScalarGridSpec(
            num_scalar_prefetch=0,
            grid=grid,
            in_specs=[
                pl.BlockSpec((tm, d_pad), lambda i, k: (i, 0)),    # x (row tile)
                pl.BlockSpec((d_pad, hk), lambda i, k: (0, k)),    # W1 chunk
                pl.BlockSpec((1, hk), lambda i, k: (0, k)),        # b1 chunk
                pl.BlockSpec((hk, d_pad), lambda i, k: (k, 0)),    # W2 chunk
                pl.BlockSpec((1, d_pad), lambda i, k: (0, 0)),     # b2
            ],
            out_specs=pl.BlockSpec((tm, d_pad), lambda i, k: (i, 0)),
            scratch_shapes=[pltpu.VMEM((tm, d_pad), jnp.float32)],
        ),
        compiler_params=pltpu.CompilerParams(
            dimension_semantics=("parallel", "arbitrary"),
            vmem_limit_bytes=vmem_limit,
        ),
    )(x_p, params["w1"], params["b1"], params["w2"], params["b2"])

    return out[:n_rows, :input_dim].reshape(orig_shape)


def reference_grn(x, w1, b1, w2, b2):
    h = jnp.maximum(x @ w1 + b1, 0.0)
    y = h @ w2 + b2
    gate = jax.nn.sigmoid(y)
    return x + gate * (y - x)


if __name__ == "__main__":
    key = jax.random.PRNGKey(0)
    batch, seq, input_dim, hidden_dim = 2, 8, 32, 64

    k_x, k_w1, k_b1, k_w2, k_b2 = jax.random.split(key, 5)
    x = jax.random.normal(k_x, (batch, seq, input_dim), dtype=jnp.float32)

    # Deterministic params; nn.Linear weights stored pre-transposed as (in, out).
    w1 = jax.random.normal(k_w1, (input_dim, hidden_dim), dtype=jnp.float32) * 0.1
    b1 = jax.random.normal(k_b1, (hidden_dim,), dtype=jnp.float32) * 0.1
    w2 = jax.random.normal(k_w2, (hidden_dim, input_dim), dtype=jnp.float32) * 0.1
    b2 = jax.random.normal(k_b2, (input_dim,), dtype=jnp.float32) * 0.1

    params = prepare_grn_params(w1, b1, w2, b2)
    out = gated_residual_network(x, params)
    out = jax.block_until_ready(out)

    ref = reference_grn(x, w1, b1, w2, b2)
    assert out.shape == ref.shape, "shape mismatch vs reference"
    assert jnp.allclose(out, ref, atol=1e-5, rtol=1e-5), "mismatch vs reference"

    print("KERNEL_OK")
</pallas_src>

<mosaic_0001>
module attributes {stable_mosaic.version = 11 : i64} {
  func.func @grn_kernel(%arg0: i32, %arg1: i32, %arg2: memref<16x128xf32, #tpu.memory_space<vmem>>, %arg3: memref<128x128xf32, #tpu.memory_space<vmem>>, %arg4: memref<1x128xf32, #tpu.memory_space<vmem>>, %arg5: memref<128x128xf32, #tpu.memory_space<vmem>>, %arg6: memref<1x128xf32, #tpu.memory_space<vmem>>, %arg7: memref<16x128xf32, #tpu.memory_space<vmem>>, %arg8: memref<16x128xf32, #tpu.memory_space<vmem>>) attributes {dimension_semantics = [#tpu.dimension_semantics<parallel>, #tpu.dimension_semantics<arbitrary>], iteration_bounds = array<i64: 1, 1>, scalar_prefetch = 0 : i64, scratch_operands = 1 : i64, tpu.core_type = #tpu.core_type<tc>, window_params = [{transform_indices = @transform_0, window_bounds = array<i64: 16, 128>}, {transform_indices = @transform_1, window_bounds = array<i64: 128, 128>}, {transform_indices = @transform_2, window_bounds = array<i64: 1, 128>}, {transform_indices = @transform_3, window_bounds = array<i64: 128, 128>}, {pipeline_mode = #tpu.pipeline_mode<synchronous>, transform_indices = @transform_4, window_bounds = array<i64: 1, 128>}, {transform_indices = @transform_5, window_bounds = array<i64: 16, 128>}]} {
    %c0_i32 = arith.constant 0 : i32
    %0 = arith.cmpi eq, %arg1, %c0_i32 : i32
    %1 = arith.extui %0 : i1 to i32
    %c0_i32_0 = arith.constant 0 : i32
    %2 = arith.cmpi ne, %1, %c0_i32_0 : i32
    scf.if %2 {
      %cst_16 = arith.constant 0.000000e+00 : f32
      %19 = vector.broadcast %cst_16 : f32 to vector<16x128xf32>
      %c0_17 = arith.constant 0 : index
      %c0_18 = arith.constant 0 : index
      %20 = vector.load %arg8[%c0_17, %c0_18] : memref<16x128xf32, #tpu.memory_space<vmem>>, vector<16x128xf32>
      tpu.vector_store %arg8[%c0_17, %c0_18], %19 {strides = array<i32>} : memref<16x128xf32, #tpu.memory_space<vmem>>, vector<16x128xf32>,
    } else {
    }
    %c0 = arith.constant 0 : index
    %c0_1 = arith.constant 0 : index
    %3 = vector.load %arg2[%c0, %c0_1] : memref<16x128xf32, #tpu.memory_space<vmem>>, vector<16x128xf32>
    %c0_2 = arith.constant 0 : index
    %c0_3 = arith.constant 0 : index
    %4 = vector.load %arg3[%c0_2, %c0_3] : memref<128x128xf32, #tpu.memory_space<vmem>>, vector<128x128xf32>
    %cst = arith.constant dense<0.000000e+00> : vector<16x128xf32>
    %5 = tpu.matmul %3, %4, %cst {dimension_numbers = #tpu.dot_dimension_numbers<[1], [0], [0], [1], [0, 0, 1, 1], [], []>} : vector<16x128xf32>, vector<128x128xf32>, vector<16x128xf32> -> vector<16x128xf32>
    %c0_4 = arith.constant 0 : index
    %c0_5 = arith.constant 0 : index
    %6 = vector.load %arg4[%c0_4, %c0_5] : memref<1x128xf32, #tpu.memory_space<vmem>>, vector<1x128xf32>
    %7 = vector.broadcast %6 : vector<1x128xf32> to vector<16x128xf32>
    %8 = arith.addf %5, %7 : vector<16x128xf32>
    %cst_6 = arith.constant 0.000000e+00 : f32
    %9 = vector.broadcast %cst_6 : f32 to vector<16x128xf32>
    %10 = arith.maximumf %8, %9 : vector<16x128xf32>
    %c0_7 = arith.constant 0 : index
    %c0_8 = arith.constant 0 : index
    %11 = vector.load %arg8[%c0_7, %c0_8] : memref<16x128xf32, #tpu.memory_space<vmem>>, vector<16x128xf32>
    %c0_9 = arith.constant 0 : index
    %c0_10 = arith.constant 0 : index
    %12 = vector.load %arg5[%c0_9, %c0_10] : memref<128x128xf32, #tpu.memory_space<vmem>>, vector<128x128xf32>
    %cst_11 = arith.constant dense<0.000000e+00> : vector<16x128xf32>
    %13 = tpu.matmul %10, %12, %cst_11 {dimension_numbers = #tpu.dot_dimension_numbers<[1], [0], [0], [1], [0, 0, 1, 1], [], []>} : vector<16x128xf32>, vector<128x128xf32>, vector<16x128xf32> -> vector<16x128xf32>
    %14 = arith.addf %11, %13 : vector<16x128xf32>
    %c0_12 = arith.constant 0 : index
    %c0_13 = arith.constant 0 : index
    %15 = vector.load %arg8[%c0_12, %c0_13] : memref<16x128xf32, #tpu.memory_space<vmem>>, vector<16x128xf32>
    tpu.vector_store %arg8[%c0_12, %c0_13], %14 {strides = array<i32>} : memref<16x128xf32, #tpu.memory_space<vmem>>, vector<16x128xf32>,
    %c0_i32_14 = arith.constant 0 : i32
    %16 = arith.cmpi eq, %arg1, %c0_i32_14 : i32
    %17 = arith.extui %16 : i1 to i32
    %c0_i32_15 = arith.constant 0 : i32
    %18 = arith.cmpi ne, %17, %c0_i32_15 : i32
    scf.if %18 {
      %c0_16 = arith.constant 0 : index
      %c0_17 = arith.constant 0 : index
      %19 = vector.load %arg8[%c0_16, %c0_17] : memref<16x128xf32, #tpu.memory_space<vmem>>, vector<16x128xf32>
      %c0_18 = arith.constant 0 : index
      %c0_19 = arith.constant 0 : index
      %20 = vector.load %arg6[%c0_18, %c0_19] : memref<1x128xf32, #tpu.memory_space<vmem>>, vector<1x128xf32>
      %21 = vector.broadcast %20 : vector<1x128xf32> to vector<16x128xf32>
      %22 = arith.addf %19, %21 : vector<16x128xf32>
      %23 = arith.negf %22 : vector<16x128xf32>
      %24 = math.exp %23 : vector<16x128xf32>
      %cst_20 = arith.constant 1.000000e+00 : f32
      %25 = vector.broadcast %cst_20 : f32 to vector<16x128xf32>
      %26 = arith.addf %25, %24 : vector<16x128xf32>
      %27 = arith.divf %25, %26 : vector<16x128xf32>
      %28 = arith.subf %22, %3 : vector<16x128xf32>
      %29 = arith.mulf %27, %28 : vector<16x128xf32>
      %30 = arith.addf %3, %29 : vector<16x128xf32>
      %c0_21 = arith.constant 0 : index
      %c0_22 = arith.constant 0 : index
      %31 = vector.load %arg7[%c0_21, %c0_22] : memref<16x128xf32, #tpu.memory_space<vmem>>, vector<16x128xf32>
      tpu.vector_store %arg7[%c0_21, %c0_22], %30 {strides = array<i32>} : memref<16x128xf32, #tpu.memory_space<vmem>>, vector<16x128xf32>,
    } else {
    }
    return
  }
  func.func @transform_0(%arg0: i32, %arg1: i32) -> (i32, i32) {
    %c0_i32 = arith.constant 0 : i32
    %c0_i32_0 = arith.constant 0 : i32
    return %arg0, %c0_i32 : i32, i32
  }
  func.func @transform_1(%arg0: i32, %arg1: i32) -> (i32, i32) {
    %c0_i32 = arith.constant 0 : i32
    %c0_i32_0 = arith.constant 0 : i32
    return %c0_i32, %arg1 : i32, i32
  }
  func.func @transform_2(%arg0: i32, %arg1: i32) -> (i32, i32) {
    %c0_i32 = arith.constant 0 : i32
    %c0_i32_0 = arith.constant 0 : i32
    return %c0_i32, %arg1 : i32, i32
  }
  func.func @transform_3(%arg0: i32, %arg1: i32) -> (i32, i32) {
    %c0_i32 = arith.constant 0 : i32
    %c0_i32_0 = arith.constant 0 : i32
    return %arg1, %c0_i32 : i32, i32
  }
  func.func @transform_4(%arg0: i32, %arg1: i32) -> (i32, i32) {
    %c0_i32 = arith.constant 0 : i32
    %c0_i32_0 = arith.constant 0 : i32
    %c0_i32_1 = arith.constant 0 : i32
    return %c0_i32, %c0_i32_0 : i32, i32
  }
  func.func @transform_5(%arg0: i32, %arg1: i32) -> (i32, i32) {
    %c0_i32 = arith.constant 0 : i32
    %c0_i32_0 = arith.constant 0 : i32
    return %arg0, %c0_i32 : i32, i32
  }
}

</mosaic_0001>

<llo_original>
// kernel: tpu_custom_call.1
$region0: #{tpu_custom_call.1}
  #allocation0 [shape = 'u32[]', space=smem, size = 0x4, offset = 0x4, fixed_abs, tag = 'smem constant byte address 0x4 - core index']
  #allocation1 [shape = 'u32[144,128]{1,0:T(1,128)}', space=vmem, size = 0x12000, scoped, tag = 'internal scratch']
  #allocation2 [shape = 'f32[16,128]{1,0:T(8,128)}', space=vmem, size = 0x2000, scoped, tag = 'scratch operand']
  %s0 = inlined_call_operand.hbm [shape: f32[16,128], index: 0, kind: input, shape index: {}]
  %s1 = inlined_call_operand.hbm [shape: f32[128,128], index: 1, kind: input, shape index: {}]
  %s2 = inlined_call_operand.vmem [shape: f32[1,128], index: 2, kind: input, shape index: {}]
  %s3 = inlined_call_operand.hbm [shape: f32[128,128], index: 3, kind: input, shape index: {}]
  %s4 = inlined_call_operand.vmem [shape: f32[1,128], index: 4, kind: input, shape index: {}]
  %s5 = inlined_call_operand.hbm [shape: f32[16,128], index: 5, kind: output, shape index: {}]
  %s6 = sld [smem:[#allocation0]]
  $region50: #{tpu_custom_call.1} parent=0
    _
  %s8 = ssub.s32 1, %s6
  %s9 = scalar_select 0, %s8, %s6
  $region1: #{tpu_custom_call.1} parent=0
    #allocation3 [shape = 'u8[8192]{0}', space=vmem, size = 0x2000, scoped, tag = 'input window, operand 0, single buffered']
    #allocation4 [shape = 's32[1]{0}', space=sflag, size = 0x4, scoped, tag = 'scoped memory for tpu_custom_call.1']
    #allocation5 [shape = 's32[1]{0}', space=sflag, size = 0x4, scoped, tag = 'scoped memory for tpu_custom_call.1']
    #allocation6 [shape = 'u8[65536]{0}', space=vmem, size = 0x10000, scoped, tag = 'input window, operand 1, single buffered']
    #allocation7 [shape = 's32[1]{0}', space=sflag, size = 0x4, scoped, tag = 'scoped memory for tpu_custom_call.1']
    #allocation8 [shape = 'u8[65536]{0}', space=vmem, size = 0x10000, scoped, tag = 'input window, operand 3, single buffered']
    #allocation9 [shape = 'u8[8192]{0}', space=vmem, size = 0x2000, scoped, tag = 'output window, operand 0, single buffered']
    %10 = vsyncpa [#allocation4], 0
    %11 = vsyncpa [#allocation7], 0
    %12 = vsyncpa [#allocation5], 0
    // Predicated region
    $region2: #{tpu_custom_call.1} parent=1 // pred_check
      _
    $region3: #{tpu_custom_call.1} parent=1 // pred_check_branch
      %14 = sbr.rel (0) target = $region5
    $region4: #{tpu_custom_call.1} parent=1 // pred_region
      %s16 = ssub.s32 256, 256
      %17 = vsyncadd [#allocation4], %s16
      %s18 = sshll.u32 [#allocation3], 4
      %s19 = int_to_ptr.vmem [resolvable:$true] %s18
      %24 = dma.hbm_to_vmem [thread:$0]  %s0, 256, %s19, [#allocation4], 128, 128, 8
    $region5: #{tpu_custom_call.1} parent=1 // pred_fallthru
      _
    // Predicated region
    $region6: #{tpu_custom_call.1} parent=1 // pred_check
      _
    $region7: #{tpu_custom_call.1} parent=1 // pred_check_branch
      %26 = sbr.rel (0) target = $region9
    $region8: #{tpu_custom_call.1} parent=1 // pred_region
      %s28 = ssub.s32 2048, 2048
      %29 = vsyncadd [#allocation7], %s28
      %s30 = sshll.u32 [#allocation6], 4
      %s31 = int_to_ptr.vmem [resolvable:$true] %s30
      %36 = dma.hbm_to_vmem [thread:$0]  %s1, 2048, %s31, [#allocation7], 128, 128, 8
    $region9: #{tpu_custom_call.1} parent=1 // pred_fallthru
      _
    // Predicated region
    $region10: #{tpu_custom_call.1} parent=1 // pred_check
      _
    $region11: #{tpu_custom_call.1} parent=1 // pred_check_branch
      %38 = sbr.rel (0) target = $region13
    $region12: #{tpu_custom_call.1} parent=1 // pred_region
      _
    $region13: #{tpu_custom_call.1} parent=1 // pred_fallthru
      _
    // Predicated region
    $region14: #{tpu_custom_call.1} parent=1 // pred_check
      _
    $region15: #{tpu_custom_call.1} parent=1 // pred_check_branch
      %40 = sbr.rel (0) target = $region17
    $region16: #{tpu_custom_call.1} parent=1 // pred_region
      %s42 = ssub.s32 2048, 2048
      %43 = vsyncadd [#allocation7], %s42
      %s44 = sshll.u32 [#allocation8], 4
      %s45 = int_to_ptr.vmem [resolvable:$true] %s44
      %50 = dma.hbm_to_vmem [thread:$0]  %s3, 2048, %s45, [#allocation7], 128, 128, 8
    $region17: #{tpu_custom_call.1} parent=1 // pred_fallthru
      _
    // Predicated region
    $region18: #{tpu_custom_call.1} parent=1 // pred_check
      _
    $region19: #{tpu_custom_call.1} parent=1 // pred_check_branch
      %52 = sbr.rel (0) target = $region21
    $region20: #{tpu_custom_call.1} parent=1 // pred_region
      _
    $region21: #{tpu_custom_call.1} parent=1 // pred_fallthru
      _
    // Predicated region
    $region22: #{tpu_custom_call.1} parent=1 // pred_check
      _
    $region23: #{tpu_custom_call.1} parent=1 // pred_check_branch
      %54 = sbr.rel (0) target = $region25
    $region24: #{tpu_custom_call.1} parent=1 // pred_region
      %55 = dma.done [#allocation4], 256
    $region25: #{tpu_custom_call.1} parent=1 // pred_fallthru
      _
    // Predicated region
    $region26: #{tpu_custom_call.1} parent=1 // pred_check
      _
    $region27: #{tpu_custom_call.1} parent=1 // pred_check_branch
      %57 = sbr.rel (0) target = $region29
    $region28: #{tpu_custom_call.1} parent=1 // pred_region
      %58 = dma.done [#allocation7], 2048
    $region29: #{tpu_custom_call.1} parent=1 // pred_fallthru
      _
    // Predicated region
    $region30: #{tpu_custom_call.1} parent=1 // pred_check
      _
    $region31: #{tpu_custom_call.1} parent=1 // pred_check_branch
      %60 = sbr.rel (0) target = $region33
    $region32: #{tpu_custom_call.1} parent=1 // pred_region
      %61 = dma.done [#allocation7], 2048
    $region33: #{tpu_custom_call.1} parent=1 // pred_fallthru
      _
    %p62 = scmp.eq.s32.totalorder 0, 0
    // Predicated region
    $region34: #{tpu_custom_call.1} parent=1 // pred_check
      %p63 = pneg %p62
    $region35: #{tpu_custom_call.1} parent=1 // pred_check_branch
      %65 = sbr.rel (%p63) target = $region37
    $region36: #{tpu_custom_call.1} parent=1 // pred_region
      %66 = vst [vmem:[#allocation2] sm:$0xff] 0.0
      %67 = vst [vmem:[#allocation2 + $0x8] sm:$0xff] 0.0
    $region37: #{tpu_custom_call.1} parent=1 // pred_fallthru
      _
    %v68 = vld [vmem:[#allocation3] sm:$0xff]
    %v69 = vld [vmem:[#allocation3 + $0x8] sm:$0xff]
    %v70 = vld [vmem:[#allocation6] sm:$0xff]
    %v71 = vld [vmem:[#allocation6 + $0x8] sm:$0xff]
    %v72 = vld [vmem:[#allocation6 + $0x10] sm:$0xff]
    %v73 = vld [vmem:[#allocation6 + $0x18] sm:$0xff]
    %v74 = vld [vmem:[#allocation6 + $0x20] sm:$0xff]
    %v75 = vld [vmem:[#allocation6 + $0x28] sm:$0xff]
    %v76 = vld [vmem:[#allocation6 + $0x30] sm:$0xff]
    %v77 = vld [vmem:[#allocation6 + $0x38] sm:$0xff]
    %v78 = vld [vmem:[#allocation6 + $0x40] sm:$0xff]
    %v79 = vld [vmem:[#allocation6 + $0x48] sm:$0xff]
    %v80 = vld [vmem:[#allocation6 + $0x50] sm:$0xff]
    %v81 = vld [vmem:[#allocation6 + $0x58] sm:$0xff]
    %v82 = vld [vmem:[#allocation6 + $0x60] sm:$0xff]
    %v83 = vld [vmem:[#allocation6 + $0x68] sm:$0xff]
    %v84 = vld [vmem:[#allocation6 + $0x70] sm:$0xff]
    %v85 = vld [vmem:[#allocation6 + $0x78] sm:$0xff]
    %v86 = vld [vmem:[%s2] sm:$0x1]
    %v88 = vlaneseq
    %v89 = vshrl.u32 %v88, 7
    %v90 = vsub.s32 0, %v89
    %v91 = vrot.slane %v86, %v90
    %93 = vmatprep.subr.mxu0 0.0
    %94 = vmatpush1.msra.mxu0 %v70
    %95 = vmatprep.subr.mxu0 0.0
    %96 = vmatpush1.msra.mxu0 %v71
    %97 = vmatprep.subr.mxu0 0.0
    %98 = vmatpush1.msra.mxu0 %v72
    %99 = vmatprep.subr.mxu0 0.0
    %100 = vmatpush1.msra.mxu0 %v73
    %101 = vmatprep.subr.mxu0 0.0
    %102 = vmatpush1.msra.mxu0 %v74
    %103 = vmatprep.subr.mxu0 0.0
    %104 = vmatpush1.msra.mxu0 %v75
    %105 = vmatprep.subr.mxu0 0.0
    %106 = vmatpush1.msra.mxu0 %v76
    %107 = vmatprep.subr.mxu0 0.0
    %108 = vmatpush1.msra.mxu0 %v77
    %109 = vmatprep.subr.mxu0 0.0
    %110 = vmatpush1.msra.mxu0 %v78
    %111 = vmatprep.subr.mxu0 0.0
    %112 = vmatpush1.msra.mxu0 %v79
    %113 = vmatprep.subr.mxu0 0.0
    %114 = vmatpush1.msra.mxu0 %v80
    %115 = vmatprep.subr.mxu0 0.0
    %116 = vmatpush1.msra.mxu0 %v81
    %117 = vmatprep.subr.mxu0 0.0
    %118 = vmatpush1.msra.mxu0 %v82
    %119 = vmatprep.subr.mxu0 0.0
    %120 = vmatpush1.msra.mxu0 %v83
    %121 = vmatprep.subr.mxu0 0.0
    %122 = vmatpush1.msra.mxu0 %v84
    %123 = vmatprep.subr.mxu0 0.0
    %124 = vmatpush1.msra.mxu0 %v85
    %125 = vmatprep.subr.mxu0 0.0
    %126 = vmatpush1.msra.mxu0 0.0
    %127 = vmatprep.subr.mxu0 0.0
    %128 = vmatpush1.msra.mxu0 0.0
    %129 = vmatprep.subr.mxu0 0.0
    %130 = vmatpush1.msra.mxu0 0.0
    %131 = vmatprep.subr.mxu0 0.0
    %132 = vmatpush1.msra.mxu0 0.0
    %133 = vmatprep.subr.mxu0 0.0
    %134 = vmatpush1.msra.mxu0 0.0
    %135 = vmatprep.subr.mxu0 0.0
    %136 = vmatpush1.msra.mxu0 0.0
    %137 = vmatprep.subr.mxu0 0.0
    %138 = vmatpush1.msra.mxu0 0.0
    %139 = vmatprep.subr.mxu0 0.0
    %140 = vmatpush1.msra.mxu0 0.0
    %141 = vmatprep.subr.mxu0 0.0
    %142 = vmatpush1.msra.mxu0 0.0
    %143 = vmatprep.subr.mxu0 0.0
    %144 = vmatpush1.msra.mxu0 0.0
    %145 = vmatprep.subr.mxu0 0.0
    %146 = vmatpush1.msra.mxu0 0.0
    %147 = vmatprep.subr.mxu0 0.0
    %148 = vmatpush1.msra.mxu0 0.0
    %149 = vmatprep.subr.mxu0 0.0
    %150 = vmatpush1.msra.mxu0 0.0
    %151 = vmatprep.subr.mxu0 0.0
    %152 = vmatpush1.msra.mxu0 0.0
    %153 = vmatprep.subr.mxu0 0.0
    %154 = vmatpush1.msra.mxu0 0.0
    %155 = vmatprep.subr.mxu0 0.0
    %156 = vmatpush1.msra.mxu0 0.0
    %157 = vmatprep.mubr.f32.mxu0 0.0
    %158 = vmatmul.mubr.f32.gmra.mrb[0].mxu0 %v68
    %v159 = vpop.f32.mrb[0].mxu0
    %v160 = vadd.f32 %v91, %v159
    %v161 = vpop.f32.mrb[0].mxu0
    %162 = vmatprep.mubr.f32.mxu0 0.0
    %163 = vmatmul.mubr.f32.gmra.mrb[0].mxu0 %v69
    %v164 = vpop.f32.mrb[0].mxu0
    %v165 = vadd.f32 %v91, %v164
    %v166 = vpop.f32.mrb[0].mxu0
    %167 = vdwg.mxu0
    %v168 = vmax.f32 %v160, 0.0
    %v169 = vmax.f32 %v165, 0.0
    %v170 = vld [vmem:[#allocation2] sm:$0xff]
    %v171 = vld [vmem:[#allocation2 + $0x8] sm:$0xff]
    %v172 = vld [vmem:[#allocation8] sm:$0xff]
    %v173 = vld [vmem:[#allocation8 + $0x8] sm:$0xff]
    %v174 = vld [vmem:[#allocation8 + $0x10] sm:$0xff]
    %v175 = vld [vmem:[#allocation8 + $0x18] sm:$0xff]
    %v176 = vld [vmem:[#allocation8 + $0x20] sm:$0xff]
    %v177 = vld [vmem:[#allocation8 + $0x28] sm:$0xff]
    %v178 = vld [vmem:[#allocation8 + $0x30] sm:$0xff]
    %v179 = vld [vmem:[#allocation8 + $0x38] sm:$0xff]
    %v180 = vld [vmem:[#allocation8 + $0x40] sm:$0xff]
    %v181 = vld [vmem:[#allocation8 + $0x48] sm:$0xff]
    %v182 = vld [vmem:[#allocation8 + $0x50] sm:$0xff]
    %v183 = vld [vmem:[#allocation8 + $0x58] sm:$0xff]
    %v184 = vld [vmem:[#allocation8 + $0x60] sm:$0xff]
    %v185 = vld [vmem:[#allocation8 + $0x68] sm:$0xff]
    %v186 = vld [vmem:[#allocation8 + $0x70] sm:$0xff]
    %v187 = vld [vmem:[#allocation8 + $0x78] sm:$0xff]
    %188 = vmatprep.subr.mxu0 0.0
    %189 = vmatpush1.msra.mxu0 %v172
    %190 = vmatprep.subr.mxu0 0.0
    %191 = vmatpush1.msra.mxu0 %v173
    %192 = vmatprep.subr.mxu0 0.0
    %193 = vmatpush1.msra.mxu0 %v174
    %194 = vmatprep.subr.mxu0 0.0
    %195 = vmatpush1.msra.mxu0 %v175
    %196 = vmatprep.subr.mxu0 0.0
    %197 = vmatpush1.msra.mxu0 %v176
    %198 = vmatprep.subr.mxu0 0.0
    %199 = vmatpush1.msra.mxu0 %v177
    %200 = vmatprep.subr.mxu0 0.0
    %201 = vmatpush1.msra.mxu0 %v178
    %202 = vmatprep.subr.mxu0 0.0
    %203 = vmatpush1.msra.mxu0 %v179
    %204 = vmatprep.subr.mxu0 0.0
    %205 = vmatpush1.msra.mxu0 %v180
    %206 = vmatprep.subr.mxu0 0.0
    %207 = vmatpush1.msra.mxu0 %v181
    %208 = vmatprep.subr.mxu0 0.0
    %209 = vmatpush1.msra.mxu0 %v182
    %210 = vmatprep.subr.mxu0 0.0
    %211 = vmatpush1.msra.mxu0 %v183
    %212 = vmatprep.subr.mxu0 0.0
    %213 = vmatpush1.msra.mxu0 %v184
    %214 = vmatprep.subr.mxu0 0.0
    %215 = vmatpush1.msra.mxu0 %v185
    %216 = vmatprep.subr.mxu0 0.0
    %217 = vmatpush1.msra.mxu0 %v186
    %218 = vmatprep.subr.mxu0 0.0
    %219 = vmatpush1.msra.mxu0 %v187
    %220 = vmatprep.subr.mxu0 0.0
    %221 = vmatpush1.msra.mxu0 0.0
    %222 = vmatprep.subr.mxu0 0.0
    %223 = vmatpush1.msra.mxu0 0.0
    %224 = vmatprep.subr.mxu0 0.0
    %225 = vmatpush1.msra.mxu0 0.0
    %226 = vmatprep.subr.mxu0 0.0
    %227 = vmatpush1.msra.mxu0 0.0
    %228 = vmatprep.subr.mxu0 0.0
    %229 = vmatpush1.msra.mxu0 0.0
    %230 = vmatprep.subr.mxu0 0.0
    %231 = vmatpush1.msra.mxu0 0.0
    %232 = vmatprep.subr.mxu0 0.0
    %233 = vmatpush1.msra.mxu0 0.0
    %234 = vmatprep.subr.mxu0 0.0
    %235 = vmatpush1.msra.mxu0 0.0
    %236 = vmatprep.subr.mxu0 0.0
    %237 = vmatpush1.msra.mxu0 0.0
    %238 = vmatprep.subr.mxu0 0.0
    %239 = vmatpush1.msra.mxu0 0.0
    %240 = vmatprep.subr.mxu0 0.0
    %241 = vmatpush1.msra.mxu0 0.0
    %242 = vmatprep.subr.mxu0 0.0
    %243 = vmatpush1.msra.mxu0 0.0
    %244 = vmatprep.subr.mxu0 0.0
    %245 = vmatpush1.msra.mxu0 0.0
    %246 = vmatprep.subr.mxu0 0.0
    %247 = vmatpush1.msra.mxu0 0.0
    %248 = vmatprep.subr.mxu0 0.0
    %249 = vmatpush1.msra.mxu0 0.0
    %250 = vmatprep.subr.mxu0 0.0
    %251 = vmatpush1.msra.mxu0 0.0
    %252 = vmatprep.mubr.f32.mxu0 0.0
    %253 = vmatmul.mubr.f32.gmra.mrb[0].mxu0 %v168
    %v254 = vpop.f32.mrb[0].mxu0
    %v255 = vadd.f32 0.0, %v254
    %v256 = vpop.f32.mrb[0].mxu0
    %257 = vmatprep.mubr.f32.mxu0 0.0
    %258 = vmatmul.mubr.f32.gmra.mrb[0].mxu0 %v169
    %v259 = vpop.f32.mrb[0].mxu0
    %v260 = vadd.f32 0.0, %v259
    %v261 = vpop.f32.mrb[0].mxu0
    %262 = vdwg.mxu0
    %v263 = vadd.f32 %v170, %v255
    %v264 = vadd.f32 %v171, %v260
    %265 = vst [vmem:[#allocation2] sm:$0xff] %v263
    %266 = vst [vmem:[#allocation2 + $0x8] sm:$0xff] %v264
    // Predicated region
    $region38: #{tpu_custom_call.1} parent=1 // pred_check
      %p267 = pneg %p62
    $region39: #{tpu_custom_call.1} parent=1 // pred_check_branch
      %269 = sbr.rel (%p267) target = $region41
    $region40: #{tpu_custom_call.1} parent=1 // pred_region
      %v270 = vld [vmem:[#allocation2] sm:$0xff]
      %v271 = vld [vmem:[#allocation2 + $0x8] sm:$0xff]
      %v272 = vld [vmem:[%s4] sm:$0x1]
      %v274 = vlaneseq
      %v275 = vshrl.u32 %v274, 7
      %v276 = vsub.s32 0, %v275
      %v277 = vrot.slane %v272, %v276
      %v279 = vadd.f32 %v270, %v277
      %v280 = vadd.f32 %v271, %v277
      %v281 = vxor.u32 %v279, 2147483648
      %v282 = vxor.u32 %v280, 2147483648
      %v283 = vmul.f32 %v281, 1.442695
      %v284 = vpow.pop %v283
      %v285 = vmul.f32 %v282, 1.442695
      %v286 = vpow.pop %v285
      %v287 = vadd.f32 %v284, 1.0
      %v288 = vadd.f32 %v286, 1.0
      %v289 = vrcp.pop %v287
      %v290 = vmul.f32 1.0, %v289
      %v291 = vrcp.pop %v288
      %v292 = vmul.f32 1.0, %v291
      %v293 = vsub.f32 %v279, %v68
      %v294 = vsub.f32 %v280, %v69
      %v295 = vmul.f32 %v290, %v293
      %v296 = vmul.f32 %v292, %v294
      %v297 = vadd.f32 %v68, %v295
      %v298 = vadd.f32 %v69, %v296
      %299 = vst [vmem:[#allocation9] sm:$0xff] %v297
      %300 = vst [vmem:[#allocation9 + $0x8] sm:$0xff] %v298
    $region41: #{tpu_custom_call.1} parent=1 // pred_fallthru
      _
    // Predicated region
    $region42: #{tpu_custom_call.1} parent=1 // pred_check
      _
    $region43: #{tpu_custom_call.1} parent=1 // pred_check_branch
      %302 = sbr.rel (0) target = $region45
    $region44: #{tpu_custom_call.1} parent=1 // pred_region
      %s304 = ssub.s32 256, 256
      %305 = vsyncadd [#allocation5], %s304
      %s306 = sshll.u32 [#allocation9], 4
      %s307 = int_to_ptr.vmem [resolvable:$true] %s306
      %312 = dma.vmem_to_hbm [thread:$0]  %s307, 256, %s5, [#allocation5], 128, 128, 8
    $region45: #{tpu_custom_call.1} parent=1 // pred_fallthru
      _
    // Predicated region
    $region46: #{tpu_custom_call.1} parent=1 // pred_check
      _
    $region47: #{tpu_custom_call.1} parent=1 // pred_check_branch
      %314 = sbr.rel (0) target = $region49
    $region48: #{tpu_custom_call.1} parent=1 // pred_region
      %315 = dma.done [#allocation5], 256
    $region49: #{tpu_custom_call.1} parent=1 // pred_fallthru
      _
    %316 = vsyncpa [#allocation4], 1
    %317 = vsyncpa [#allocation7], 1
    %318 = vsyncpa [#allocation5], 1

</llo_original>
